<compile_context>
chip_gen: v7x
topology: tpu7x:2x2x1
jax: 0.10.0
libtpu: 0.0.40
codegen_flags: <defaults>
</compile_context>

<pallas_src>
import functools

import jax
import jax.numpy as jnp
import numpy as np
from jax.experimental import pallas as pl
from jax.experimental.pallas import tpu as pltpu


def _round_up(n, m):
    return ((n + m - 1) // m) * m


def _make_mlp_kernel(n_layers):
    """Fused MLP kernel for `n_layers` Linear layers.

    Ref layout: x_ref, (w_ref, b_ref) * n_layers, o_ref.
    Weights arrive pre-transposed to (in, out) in bf16; biases are (1, out)
    f32 (last layer lane-padded to a multiple of 128 with -1e30 in the padded
    class lanes so they vanish under log_softmax).  Matmuls run on the MXU in
    bf16 with f32 accumulation; bias/tanh/log_softmax stay in f32.
    """

    def kernel(*refs):
        x_ref, o_ref = refs[0], refs[-1]
        wb = refs[1:-1]

        # f32 -> bf16 cast on the VPU (free slot) instead of a wrapper-side
        # XLA cast pass.
        h = x_ref[...].astype(jnp.bfloat16)

        logits = None
        for li in range(n_layers):
            w_ref, b_ref = wb[2 * li], wb[2 * li + 1]
            z = jnp.dot(h, w_ref[...],
                        preferred_element_type=jnp.float32) + b_ref[...]
            if li < n_layers - 1:
                h = jnp.tanh(z).astype(jnp.bfloat16)
            else:
                logits = z

        # classification=True: numerically stable log_softmax over dim=1.
        # Padded class lanes carry a -1e30 bias -> exp() underflows to 0.
        m = jnp.max(logits, axis=1, keepdims=True)
        s = logits - m
        lse = jnp.log(jnp.sum(jnp.exp(s), axis=1, keepdims=True))
        o_ref[...] = (s - lse).astype(o_ref.dtype)     # bf16 write-back

    return kernel


def prepare_params(params):
    """One-time host-side weight prep (hoisted out of the per-call path):
    transpose each W to (in, out) and cast to bf16; lane-pad the last layer's
    class dim to a multiple of 128 (padded classes get a -1e30 bias); reshape
    biases to (1, out) f32.  Returns (flat_param_tuple, out_dim)."""
    n = len(params)
    out_dim = params[-1][0].shape[0]
    out_pad = _round_up(out_dim, 128)
    flat = []
    for i, (w, b) in enumerate(params):
        w = jnp.asarray(w)
        b = jnp.asarray(b)
        if i == n - 1:
            wt = jnp.zeros((w.shape[1], out_pad), jnp.bfloat16)
            wt = wt.at[:, :out_dim].set(w.T.astype(jnp.bfloat16))
            br = jnp.full((1, out_pad), -1e30, jnp.float32)
            br = br.at[0, :out_dim].set(b.astype(jnp.float32))
        else:
            wt = w.T.astype(jnp.bfloat16)
            br = b.reshape(1, -1).astype(jnp.float32)
        flat.append(wt)
        flat.append(br)
    return tuple(flat), out_dim


@functools.partial(jax.jit, static_argnames=("out_dim", "batch_tile"))
def perceptron_forward(x, prepped, *, out_dim, batch_tile=512):
    """x: (B, ...) float32; prepped: output of prepare_params()."""
    B = x.shape[0]
    x_flat = x.reshape(B, -1).astype(jnp.float32)   # torch: x.view(x.size(0), -1)
    in_feat = x_flat.shape[1]

    n_layers = len(prepped) // 2
    layer_outs = [prepped[2 * i].shape[1] for i in range(n_layers)]
    out_pad = layer_outs[-1]

    # Batch tiling: big tiles amortize the ~0.35 us/step grid overhead; only
    # shrink for tiny B.  Multiple of 16 keeps the bf16 output block aligned.
    tb = min(batch_tile, _round_up(B, 16))
    tb = _round_up(tb, 16)
    b_pad = _round_up(B, tb)
    if b_pad != B:
        x_flat = jnp.pad(x_flat, ((0, b_pad - B), (0, 0)))
    grid = (b_pad // tb,)

    # v7x has 2 TensorCores per chip; only CORE_PARALLEL actually shards the
    # grid across them.  On v5e/v6e (1 TC) stick with "parallel".
    kind = jax.devices()[0].device_kind.lower()
    if grid[0] >= 2 and ("v7" in kind or "7x" in kind):
        dim_sems = (pltpu.CORE_PARALLEL,)
    else:
        dim_sems = ("parallel",)

    def resident(a):
        # Constant block index -> DMA'd once, stays VMEM-resident.
        return pl.BlockSpec(a.shape, lambda i: (0, 0))

    in_specs = [pl.BlockSpec((tb, in_feat), lambda i: (i, 0))]
    in_specs += [resident(a) for a in prepped]
    out_spec = pl.BlockSpec((tb, out_pad), lambda i: (i, 0))

    # VMEM budget: double-buffered x/out blocks + resident params (2 bufs) +
    # f32 intermediates, with headroom; clamp to [16 MiB, 64 MiB] so it is
    # valid on v5e (16 MiB scoped default) through v7x (64 MiB physical).
    resident_bytes = 2 * sum(int(a.size) * a.dtype.itemsize for a in prepped)
    stream_bytes = 2 * (tb * in_feat * 4 + tb * out_pad * 2)
    interm_bytes = 3 * tb * (sum(layer_outs)) * 4
    vmem_limit = int(min(64 * 2 ** 20,
                         max(16 * 2 ** 20,
                             4 * (resident_bytes + stream_bytes + interm_bytes))))

    # Cost estimate kept in sync with dtypes: f32 input read, bf16 weights,
    # f32 biases, bf16 output write.
    chain = [in_feat] + layer_outs
    flops = 2 * b_pad * sum(a * b for a, b in zip(chain[:-1], chain[1:]))
    transcendentals = b_pad * (sum(layer_outs[:-1]) + out_pad)   # tanh + exp
    bytes_accessed = (b_pad * in_feat * 4
                      + sum(int(a.size) * a.dtype.itemsize for a in prepped)
                      + b_pad * out_pad * 2)

    out = pl.pallas_call(
        _make_mlp_kernel(n_layers),
        out_shape=jax.ShapeDtypeStruct((b_pad, out_pad), jnp.bfloat16),
        grid=grid,
        in_specs=in_specs,
        out_specs=out_spec,
        compiler_params=pltpu.CompilerParams(
            dimension_semantics=dim_sems,
            vmem_limit_bytes=vmem_limit),
        cost_estimate=pl.CostEstimate(flops=flops,
                                      transcendentals=transcendentals,
                                      bytes_accessed=bytes_accessed),
    )(x_flat, *prepped)

    # Slice off batch/class padding and restore f32; fuses under this jit
    # (tiny (B, out_dim) pass) instead of re-reading the padded buffer.
    return out[:B, :out_dim].astype(jnp.float32)


def init_params(key, layers, sigma_w=1.0, sigma_b=1.0, scaling=False,
                first_layer_normal=False):
    """Deterministic re-implementation of Perceptron.reset_parameters
    (normal samplers; scaling=False divides W by sqrt(in_features))."""
    params = []
    for l_in, l_out in zip(layers[:-1], layers[1:]):
        key, kw, kb = jax.random.split(key, 3)
        w = jax.random.normal(kw, (l_out, l_in), dtype=jnp.float32) * sigma_w
        b = jax.random.normal(kb, (l_out,), dtype=jnp.float32) * sigma_b
        if not scaling:
            w = w / np.sqrt(l_in)
        params.append((w, b))
    return params


def perceptron_reference(x, params, matmul_dtype=jnp.float32):
    """Pure-JAX reference. matmul_dtype=bf16 mirrors the kernel's matmul
    quantization (output kept in f32)."""
    h = x.reshape(x.shape[0], -1).astype(matmul_dtype)
    for (w, b) in params[:-1]:
        z = jnp.dot(h, w.T.astype(matmul_dtype),
                    preferred_element_type=jnp.float32) + b
        h = jnp.tanh(z).astype(matmul_dtype)
    w, b = params[-1]
    logits = jnp.dot(h, w.T.astype(matmul_dtype),
                     preferred_element_type=jnp.float32) + b
    return jax.nn.log_softmax(logits, axis=1)


if __name__ == "__main__":
    key = jax.random.PRNGKey(0)

    # Input: batch=2, channels=4, spatial=4x4 -> flattened feature dim = 64
    B, C, H, W = 2, 4, 4, 4
    layers = [C * H * W, 32, 32, 10]   # 64 -> 32 -> 32 -> 10

    key, kx = jax.random.split(key)
    x = jax.random.normal(kx, (B, C, H, W), dtype=jnp.float32)

    params = init_params(key, layers)
    prepped, out_dim = prepare_params(params)     # one-time weight prep

    out = perceptron_forward(x, prepped, out_dim=out_dim)
    out = jax.block_until_ready(out)
    assert out.shape == (B, layers[-1])
    assert bool(jnp.all(jnp.isfinite(out)))

    # Check vs a reference using the same bf16 matmul operands (tolerance
    # covers the bf16 output write-back quantization).
    ref_bf16 = perceptron_reference(x, params, matmul_dtype=jnp.bfloat16)
    assert jnp.allclose(out, ref_bf16, atol=2e-2, rtol=2e-2), \
        "mismatch vs bf16 reference"

    # Loose semantic check vs the full-f32 reference.
    ref_f32 = perceptron_reference(x, params, matmul_dtype=jnp.float32)
    assert jnp.allclose(out, ref_f32, atol=6e-2, rtol=6e-2), \
        "mismatch vs f32 reference"

    print("KERNEL_OK")
</pallas_src>

<mosaic_0001>
module attributes {stable_mosaic.version = 11 : i64} {
  func.func @kernel(%arg0: i32, %arg1: memref<16x64xf32, #tpu.memory_space<vmem>>, %arg2: memref<64x32xbf16, #tpu.memory_space<vmem>>, %arg3: memref<1x32xf32, #tpu.memory_space<vmem>>, %arg4: memref<32x32xbf16, #tpu.memory_space<vmem>>, %arg5: memref<1x32xf32, #tpu.memory_space<vmem>>, %arg6: memref<32x128xbf16, #tpu.memory_space<vmem>>, %arg7: memref<1x128xf32, #tpu.memory_space<vmem>>, %arg8: memref<16x128xbf16, #tpu.memory_space<vmem>>) attributes {dimension_semantics = [#tpu.dimension_semantics<parallel>], iteration_bounds = array<i64: 1>, scalar_prefetch = 0 : i64, scratch_operands = 0 : i64, tpu.core_type = #tpu.core_type<tc>, window_params = [{transform_indices = @transform_0, window_bounds = array<i64: 16, 64>}, {pipeline_mode = #tpu.pipeline_mode<synchronous>, transform_indices = @transform_1, window_bounds = array<i64: 64, 32>}, {pipeline_mode = #tpu.pipeline_mode<synchronous>, transform_indices = @transform_2, window_bounds = array<i64: 1, 32>}, {pipeline_mode = #tpu.pipeline_mode<synchronous>, transform_indices = @transform_3, window_bounds = array<i64: 32, 32>}, {pipeline_mode = #tpu.pipeline_mode<synchronous>, transform_indices = @transform_4, window_bounds = array<i64: 1, 32>}, {pipeline_mode = #tpu.pipeline_mode<synchronous>, transform_indices = @transform_5, window_bounds = array<i64: 32, 128>}, {pipeline_mode = #tpu.pipeline_mode<synchronous>, transform_indices = @transform_6, window_bounds = array<i64: 1, 128>}, {transform_indices = @transform_7, window_bounds = array<i64: 16, 128>}]} {
    %c0 = arith.constant 0 : index
    %c0_0 = arith.constant 0 : index
    %0 = vector.load %arg1[%c0, %c0_0] : memref<16x64xf32, #tpu.memory_space<vmem>>, vector<16x64xf32>
    %1 = arith.truncf %0 : vector<16x64xf32> to vector<16x64xbf16>
    %c0_1 = arith.constant 0 : index
    %c0_2 = arith.constant 0 : index
    %2 = vector.load %arg2[%c0_1, %c0_2] : memref<64x32xbf16, #tpu.memory_space<vmem>>, vector<64x32xbf16>
    %cst = arith.constant dense<0.000000e+00> : vector<16x32xf32>
    %3 = tpu.matmul %1, %2, %cst {dimension_numbers = #tpu.dot_dimension_numbers<[1], [0], [0], [1], [0, 0, 1, 1], [], []>} : vector<16x64xbf16>, vector<64x32xbf16>, vector<16x32xf32> -> vector<16x32xf32>
    %c0_3 = arith.constant 0 : index
    %c0_4 = arith.constant 0 : index
    %4 = vector.load %arg3[%c0_3, %c0_4] : memref<1x32xf32, #tpu.memory_space<vmem>>, vector<1x32xf32>
    %5 = vector.broadcast %4 : vector<1x32xf32> to vector<16x32xf32>
    %6 = arith.addf %3, %5 : vector<16x32xf32>
    %7 = math.tanh %6 : vector<16x32xf32>
    %8 = arith.truncf %7 : vector<16x32xf32> to vector<16x32xbf16>
    %c0_5 = arith.constant 0 : index
    %c0_6 = arith.constant 0 : index
    %9 = vector.load %arg4[%c0_5, %c0_6] : memref<32x32xbf16, #tpu.memory_space<vmem>>, vector<32x32xbf16>
    %cst_7 = arith.constant dense<0.000000e+00> : vector<16x32xf32>
    %10 = tpu.matmul %8, %9, %cst_7 {dimension_numbers = #tpu.dot_dimension_numbers<[1], [0], [0], [1], [0, 0, 1, 1], [], []>} : vector<16x32xbf16>, vector<32x32xbf16>, vector<16x32xf32> -> vector<16x32xf32>
    %c0_8 = arith.constant 0 : index
    %c0_9 = arith.constant 0 : index
    %11 = vector.load %arg5[%c0_8, %c0_9] : memref<1x32xf32, #tpu.memory_space<vmem>>, vector<1x32xf32>
    %12 = vector.broadcast %11 : vector<1x32xf32> to vector<16x32xf32>
    %13 = arith.addf %10, %12 : vector<16x32xf32>
    %14 = math.tanh %13 : vector<16x32xf32>
    %15 = arith.truncf %14 : vector<16x32xf32> to vector<16x32xbf16>
    %c0_10 = arith.constant 0 : index
    %c0_11 = arith.constant 0 : index
    %16 = vector.load %arg6[%c0_10, %c0_11] : memref<32x128xbf16, #tpu.memory_space<vmem>>, vector<32x128xbf16>
    %cst_12 = arith.constant dense<0.000000e+00> : vector<16x128xf32>
    %17 = tpu.matmul %15, %16, %cst_12 {dimension_numbers = #tpu.dot_dimension_numbers<[1], [0], [0], [1], [0, 0, 1, 1], [], []>} : vector<16x32xbf16>, vector<32x128xbf16>, vector<16x128xf32> -> vector<16x128xf32>
    %c0_13 = arith.constant 0 : index
    %c0_14 = arith.constant 0 : index
    %18 = vector.load %arg7[%c0_13, %c0_14] : memref<1x128xf32, #tpu.memory_space<vmem>>, vector<1x128xf32>
    %19 = vector.broadcast %18 : vector<1x128xf32> to vector<16x128xf32>
    %20 = arith.addf %17, %19 : vector<16x128xf32>
    %cst_15 = arith.constant dense<0xFF800000> : vector<16xf32>
    %21 = vector.multi_reduction <maximumf>, %20, %cst_15 [1] : vector<16x128xf32> to vector<16xf32>
    %22 = vector.shape_cast %21 : vector<16xf32> to vector<16x1xf32>
    %23 = vector.broadcast %22 : vector<16x1xf32> to vector<16x128xf32>
    %24 = arith.subf %20, %23 : vector<16x128xf32>
    %25 = math.exp %24 : vector<16x128xf32>
    %cst_16 = arith.constant dense<0.000000e+00> : vector<16xf32>
    %26 = vector.multi_reduction <add>, %25, %cst_16 [1] : vector<16x128xf32> to vector<16xf32>
    %27 = vector.shape_cast %26 : vector<16xf32> to vector<16x1xf32>
    %28 = math.log %27 : vector<16x1xf32>
    %29 = vector.broadcast %28 : vector<16x1xf32> to vector<16x128xf32>
    %30 = arith.subf %24, %29 : vector<16x128xf32>
    %31 = arith.truncf %30 : vector<16x128xf32> to vector<16x128xbf16>
    %c0_17 = arith.constant 0 : index
    %c0_18 = arith.constant 0 : index
    %32 = vector.load %arg8[%c0_17, %c0_18] : memref<16x128xbf16, #tpu.memory_space<vmem>>, vector<16x128xbf16>
    tpu.vector_store %arg8[%c0_17, %c0_18], %31 {strides = array<i32>} : memref<16x128xbf16, #tpu.memory_space<vmem>>, vector<16x128xbf16>,
    return
  }
  func.func @transform_0(%arg0: i32) -> (i32, i32) {
    %c0_i32 = arith.constant 0 : i32
    %c0_i32_0 = arith.constant 0 : i32
    return %arg0, %c0_i32 : i32, i32
  }
  func.func @transform_1(%arg0: i32) -> (i32, i32) {
    %c0_i32 = arith.constant 0 : i32
    %c0_i32_0 = arith.constant 0 : i32
    %c0_i32_1 = arith.constant 0 : i32
    return %c0_i32, %c0_i32_0 : i32, i32
  }
  func.func @transform_2(%arg0: i32) -> (i32, i32) {
    %c0_i32 = arith.constant 0 : i32
    %c0_i32_0 = arith.constant 0 : i32
    %c0_i32_1 = arith.constant 0 : i32
    return %c0_i32, %c0_i32_0 : i32, i32
  }
  func.func @transform_3(%arg0: i32) -> (i32, i32) {
    %c0_i32 = arith.constant 0 : i32
    %c0_i32_0 = arith.constant 0 : i32
    %c0_i32_1 = arith.constant 0 : i32
    return %c0_i32, %c0_i32_0 : i32, i32
  }
  func.func @transform_4(%arg0: i32) -> (i32, i32) {
    %c0_i32 = arith.constant 0 : i32
    %c0_i32_0 = arith.constant 0 : i32
    %c0_i32_1 = arith.constant 0 : i32
    return %c0_i32, %c0_i32_0 : i32, i32
  }
  func.func @transform_5(%arg0: i32) -> (i32, i32) {
    %c0_i32 = arith.constant 0 : i32
    %c0_i32_0 = arith.constant 0 : i32
    %c0_i32_1 = arith.constant 0 : i32
    return %c0_i32, %c0_i32_0 : i32, i32
  }
  func.func @transform_6(%arg0: i32) -> (i32, i32) {
    %c0_i32 = arith.constant 0 : i32
    %c0_i32_0 = arith.constant 0 : i32
    %c0_i32_1 = arith.constant 0 : i32
    return %c0_i32, %c0_i32_0 : i32, i32
  }
  func.func @transform_7(%arg0: i32) -> (i32, i32) {
    %c0_i32 = arith.constant 0 : i32
    %c0_i32_0 = arith.constant 0 : i32
    return %arg0, %c0_i32 : i32, i32
  }
}

</mosaic_0001>

<llo_original>
// kernel: perceptron_forward.1
$region0: #{perceptron_forward.1}
  #allocation0 [shape = 'u32[]', space=smem, size = 0x4, offset = 0x4, fixed_abs, tag = 'smem constant byte address 0x4 - core index']
  #allocation1 [shape = 'u32[144,128]{1,0:T(1,128)}', space=vmem, size = 0x12000, scoped, tag = 'internal scratch']
  %s0 = inlined_call_operand.vmem [shape: f32[16,64], index: 0, kind: input, shape index: {}]
  %s1 = inlined_call_operand.vmem [shape: bf16[64,32], index: 1, kind: input, shape index: {}]
  %s2 = inlined_call_operand.vmem [shape: f32[1,32], index: 2, kind: input, shape index: {}]
  %s3 = inlined_call_operand.vmem [shape: bf16[32,32], index: 3, kind: input, shape index: {}]
  %s4 = inlined_call_operand.vmem [shape: f32[1,32], index: 4, kind: input, shape index: {}]
  %s5 = inlined_call_operand.vmem [shape: bf16[32,128], index: 5, kind: input, shape index: {}]
  %s6 = inlined_call_operand.vmem [shape: f32[1,128], index: 6, kind: input, shape index: {}]
  %s7 = inlined_call_operand.vmem [shape: bf16[16,128], index: 7, kind: output, shape index: {}]
  %s8 = sld [smem:[#allocation0]]
  $region38: #{perceptron_forward.1} parent=0
    _
  %s10 = ssub.s32 1, %s8
  %s11 = scalar_select 0, %s10, %s8
  // Predicated region
  $region2: #{perceptron_forward.1} parent=0 // pred_check
    _
  $region3: #{perceptron_forward.1} parent=0 // pred_check_branch
    %13 = sbr.rel (0) target = $region5
  $region4: #{perceptron_forward.1} parent=0 // pred_region
    _
  $region5: #{perceptron_forward.1} parent=0 // pred_fallthru
    _
  // Predicated region
  $region6: #{perceptron_forward.1} parent=0 // pred_check
    _
  $region7: #{perceptron_forward.1} parent=0 // pred_check_branch
    %15 = sbr.rel (0) target = $region9
  $region8: #{perceptron_forward.1} parent=0 // pred_region
    _
  $region9: #{perceptron_forward.1} parent=0 // pred_fallthru
    _
  // Predicated region
  $region10: #{perceptron_forward.1} parent=0 // pred_check
    _
  $region11: #{perceptron_forward.1} parent=0 // pred_check_branch
    %17 = sbr.rel (0) target = $region13
  $region12: #{perceptron_forward.1} parent=0 // pred_region
    _
  $region13: #{perceptron_forward.1} parent=0 // pred_fallthru
    _
  // Predicated region
  $region14: #{perceptron_forward.1} parent=0 // pred_check
    _
  $region15: #{perceptron_forward.1} parent=0 // pred_check_branch
    %19 = sbr.rel (0) target = $region17
  $region16: #{perceptron_forward.1} parent=0 // pred_region
    _
  $region17: #{perceptron_forward.1} parent=0 // pred_fallthru
    _
  // Predicated region
  $region18: #{perceptron_forward.1} parent=0 // pred_check
    _
  $region19: #{perceptron_forward.1} parent=0 // pred_check_branch
    %21 = sbr.rel (0) target = $region21
  $region20: #{perceptron_forward.1} parent=0 // pred_region
    _
  $region21: #{perceptron_forward.1} parent=0 // pred_fallthru
    _
  // Predicated region
  $region22: #{perceptron_forward.1} parent=0 // pred_check
    _
  $region23: #{perceptron_forward.1} parent=0 // pred_check_branch
    %23 = sbr.rel (0) target = $region25
  $region24: #{perceptron_forward.1} parent=0 // pred_region
    _
  $region25: #{perceptron_forward.1} parent=0 // pred_fallthru
    _
  // Predicated region
  $region26: #{perceptron_forward.1} parent=0 // pred_check
    _
  $region27: #{perceptron_forward.1} parent=0 // pred_check_branch
    %25 = sbr.rel (0) target = $region29
  $region28: #{perceptron_forward.1} parent=0 // pred_region
    _
  $region29: #{perceptron_forward.1} parent=0 // pred_fallthru
    _
  %v27 = vld [vmem:[%s0] sm:$0xff]
  %v28 = vld [vmem:[%s0 + $0x8] sm:$0xff]
  %v29 = vpack.c.bf16 %v28, %v27
  %v30 = vld [vmem:[%s1] sm:$0xf]
  %v31 = vld [vmem:[%s1 + $0x4] sm:$0xf]
  %v32 = vld [vmem:[%s1 + $0x8] sm:$0xf]
  %v33 = vld [vmem:[%s1 + $0xc] sm:$0xf]
  %v34 = vld [vmem:[%s1 + $0x10] sm:$0xf]
  %v35 = vld [vmem:[%s1 + $0x14] sm:$0xf]
  %v36 = vld [vmem:[%s1 + $0x18] sm:$0xf]
  %v37 = vld [vmem:[%s1 + $0x1c] sm:$0xf]
  %v38 = vld [vmem:[%s2] sm:$0x1]
  %v40 = vlaneseq
  %v41 = vshrl.u32 %v40, 7
  %v42 = vsub.s32 0, %v41
  %v43 = vrot.slane %v38, %v42
  %v53 = vunpack.c.l.b16 %v30
  %v54 = vunpack.c.l.b16 %v31
  %v55 = vunpack.c.l.b16 %v32
  %v56 = vunpack.c.l.b16 %v33
  %v57 = vunpack.c.l.b16 %v34
  %v58 = vunpack.c.l.b16 %v35
  %v59 = vunpack.c.l.b16 %v36
  %v60 = vunpack.c.l.b16 %v37
  %v61 = vpack.c.b16 %v54, %v53
  %v62 = vpack.c.b16 %v56, %v55
  %v63 = vpack.c.b16 %v58, %v57
  %v64 = vpack.c.b16 %v60, %v59
  %vm69 = vcmask 523264
  %v71 = vsel %vm69, %v29, 0
  %73 = vmatprep.subr.bf16.mxu0 0
  %74 = vmatpush1.bf16.msra.mxu0 %v61
  %75 = vmatprep.subr.bf16.mxu0 0
  %76 = vmatpush1.bf16.msra.mxu0 %v62
  %77 = vmatprep.subr.bf16.mxu0 0
  %78 = vmatpush1.bf16.msra.mxu0 %v63
  %79 = vmatprep.subr.bf16.mxu0 0
  %80 = vmatpush1.bf16.msra.mxu0 %v64
  %81 = vmatprep.subr.bf16.mxu0 0
  %82 = vmatpush1.bf16.msra.mxu0 0
  %83 = vmatprep.subr.bf16.mxu0 0
  %84 = vmatpush1.bf16.msra.mxu0 0
  %85 = vmatprep.subr.bf16.mxu0 0
  %86 = vmatpush1.bf16.msra.mxu0 0
  %87 = vmatprep.subr.bf16.mxu0 0
  %88 = vmatpush1.bf16.msra.mxu0 0
  %89 = vmatprep.subr.bf16.mxu0 0
  %90 = vmatpush1.bf16.msra.mxu0 0
  %91 = vmatprep.subr.bf16.mxu0 0
  %92 = vmatpush1.bf16.msra.mxu0 0
  %93 = vmatprep.subr.bf16.mxu0 0
  %94 = vmatpush1.bf16.msra.mxu0 0
  %95 = vmatprep.subr.bf16.mxu0 0
  %96 = vmatpush1.bf16.msra.mxu0 0
  %97 = vmatprep.subr.bf16.mxu0 0
  %98 = vmatpush1.bf16.msra.mxu0 0
  %99 = vmatprep.subr.bf16.mxu0 0
  %100 = vmatpush1.bf16.msra.mxu0 0
  %101 = vmatprep.subr.bf16.mxu0 0
  %102 = vmatpush1.bf16.msra.mxu0 0
  %103 = vmatprep.subr.bf16.mxu0 0
  %104 = vmatpush1.bf16.msra.mxu0 0
  %105 = vmatprep.mubr.bf16.mxu0 0
  %106 = vmatmul.mubr.bf16.gmra.mrb[0].mxu0 %v71
  %v107 = vpop.f32.mrb[0].mxu0
  %v108 = vadd.f32 %v43, %v107
  %v109 = vpop.f32.mrb[0].mxu0
  %v110 = vpop.f32.mrb[0].mxu0
  %v111 = vadd.f32 %v43, %v110
  %v112 = vpop.f32.mrb[0].mxu0
  %113 = vdwg.mxu0
  %v114 = vtanh.pop %v108
  %v115 = vtanh.pop %v111
  %v116 = vpack.c.bf16 %v115, %v114
  %v117 = vld [vmem:[%s3] sm:$0xf]
  %v118 = vld [vmem:[%s3 + $0x4] sm:$0xf]
  %v119 = vld [vmem:[%s3 + $0x8] sm:$0xf]
  %v120 = vld [vmem:[%s3 + $0xc] sm:$0xf]
  %v121 = vld [vmem:[%s4] sm:$0x1]
  %v123 = vlaneseq
  %v124 = vshrl.u32 %v123, 7
  %v125 = vsub.s32 0, %v124
  %v126 = vrot.slane %v121, %v125
  %v132 = vunpack.c.l.b16 %v117
  %v133 = vunpack.c.l.b16 %v118
  %v134 = vunpack.c.l.b16 %v119
  %v135 = vunpack.c.l.b16 %v120
  %v136 = vpack.c.b16 %v133, %v132
  %v137 = vpack.c.b16 %v135, %v134
  %vm140 = vcmask 261120
  %v142 = vsel %vm140, %v116, 0
  %144 = vmatprep.subr.bf16.mxu0 0
  %145 = vmatpush1.bf16.msra.mxu0 %v136
  %146 = vmatprep.subr.bf16.mxu0 0
  %147 = vmatpush1.bf16.msra.mxu0 %v137
  %148 = vmatprep.subr.bf16.mxu0 0
  %149 = vmatpush1.bf16.msra.mxu0 0
  %150 = vmatprep.subr.bf16.mxu0 0
  %151 = vmatpush1.bf16.msra.mxu0 0
  %152 = vmatprep.subr.bf16.mxu0 0
  %153 = vmatpush1.bf16.msra.mxu0 0
  %154 = vmatprep.subr.bf16.mxu0 0
  %155 = vmatpush1.bf16.msra.mxu0 0
  %156 = vmatprep.subr.bf16.mxu0 0
  %157 = vmatpush1.bf16.msra.mxu0 0
  %158 = vmatprep.subr.bf16.mxu0 0
  %159 = vmatpush1.bf16.msra.mxu0 0
  %160 = vmatprep.subr.bf16.mxu0 0
  %161 = vmatpush1.bf16.msra.mxu0 0
  %162 = vmatprep.subr.bf16.mxu0 0
  %163 = vmatpush1.bf16.msra.mxu0 0
  %164 = vmatprep.subr.bf16.mxu0 0
  %165 = vmatpush1.bf16.msra.mxu0 0
  %166 = vmatprep.subr.bf16.mxu0 0
  %167 = vmatpush1.bf16.msra.mxu0 0
  %168 = vmatprep.subr.bf16.mxu0 0
  %169 = vmatpush1.bf16.msra.mxu0 0
  %170 = vmatprep.subr.bf16.mxu0 0
  %171 = vmatpush1.bf16.msra.mxu0 0
  %172 = vmatprep.subr.bf16.mxu0 0
  %173 = vmatpush1.bf16.msra.mxu0 0
  %174 = vmatprep.subr.bf16.mxu0 0
  %175 = vmatpush1.bf16.msra.mxu0 0
  %176 = vmatprep.mubr.bf16.mxu0 0
  %177 = vmatmul.mubr.bf16.gmra.mrb[0].mxu0 %v142
  %v178 = vpop.f32.mrb[0].mxu0
  %v179 = vadd.f32 %v126, %v178
  %v180 = vpop.f32.mrb[0].mxu0
  %v181 = vpop.f32.mrb[0].mxu0
  %v182 = vadd.f32 %v126, %v181
  %v183 = vpop.f32.mrb[0].mxu0
  %184 = vdwg.mxu0
  %v185 = vtanh.pop %v179
  %v186 = vtanh.pop %v182
  %v187 = vpack.c.bf16 %v186, %v185
  %v188 = vld [vmem:[%s5] sm:$0xf]
  %v189 = vld [vmem:[%s5 + $0x4] sm:$0xf]
  %v190 = vld [vmem:[%s5 + $0x8] sm:$0xf]
  %v191 = vld [vmem:[%s5 + $0xc] sm:$0xf]
  %v192 = vld [vmem:[%s6] sm:$0x1]
  %v194 = vlaneseq
  %v195 = vshrl.u32 %v194, 7
  %v196 = vsub.s32 0, %v195
  %v197 = vrot.slane %v192, %v196
  %v203 = vunpack.c.l.b16 %v188
  %v204 = vunpack.c.l.b16 %v189
  %v205 = vunpack.c.l.b16 %v190
  %v206 = vunpack.c.l.b16 %v191
  %v207 = vpack.c.b16 %v204, %v203
  %v208 = vpack.c.b16 %v206, %v205
  %v212 = vsel %vm140, %v187, 0
  %214 = vmatprep.subr.bf16.mxu0 0
  %215 = vmatpush1.bf16.msra.mxu0 %v207
  %216 = vmatprep.subr.bf16.mxu0 0
  %217 = vmatpush1.bf16.msra.mxu0 %v208
  %218 = vmatprep.subr.bf16.mxu0 0
  %219 = vmatpush1.bf16.msra.mxu0 0
  %220 = vmatprep.subr.bf16.mxu0 0
  %221 = vmatpush1.bf16.msra.mxu0 0
  %222 = vmatprep.subr.bf16.mxu0 0
  %223 = vmatpush1.bf16.msra.mxu0 0
  %224 = vmatprep.subr.bf16.mxu0 0
  %225 = vmatpush1.bf16.msra.mxu0 0
  %226 = vmatprep.subr.bf16.mxu0 0
  %227 = vmatpush1.bf16.msra.mxu0 0
  %228 = vmatprep.subr.bf16.mxu0 0
  %229 = vmatpush1.bf16.msra.mxu0 0
  %230 = vmatprep.subr.bf16.mxu0 0
  %231 = vmatpush1.bf16.msra.mxu0 0
  %232 = vmatprep.subr.bf16.mxu0 0
  %233 = vmatpush1.bf16.msra.mxu0 0
  %234 = vmatprep.subr.bf16.mxu0 0
  %235 = vmatpush1.bf16.msra.mxu0 0
  %236 = vmatprep.subr.bf16.mxu0 0
  %237 = vmatpush1.bf16.msra.mxu0 0
  %238 = vmatprep.subr.bf16.mxu0 0
  %239 = vmatpush1.bf16.msra.mxu0 0
  %240 = vmatprep.subr.bf16.mxu0 0
  %241 = vmatpush1.bf16.msra.mxu0 0
  %242 = vmatprep.subr.bf16.mxu0 0
  %243 = vmatpush1.bf16.msra.mxu0 0
  %244 = vmatprep.subr.bf16.mxu0 0
  %245 = vmatpush1.bf16.msra.mxu0 0
  %246 = vmatprep.mubr.bf16.mxu0 0
  %247 = vmatmul.mubr.bf16.gmra.mrb[0].mxu0 %v212
  %v248 = vpop.f32.mrb[0].mxu0
  %v249 = vadd.f32 %v197, %v248
  %v250 = vpop.f32.mrb[0].mxu0
  %v251 = vpop.f32.mrb[0].mxu0
  %v252 = vadd.f32 %v197, %v251
  %v253 = vpop.f32.mrb[0].mxu0
  %254 = vdwg.mxu0
  %255 = vmax.xlane.f32.xlu0 %v249
  %v256 = vpop.xlane.xlu0 %255
  %257 = vmax.xlane.f32.xlu0 %v252
  %v258 = vpop.xlane.xlu0 %257
  %v259 = vsub.f32 %v249, %v256
  %v260 = vsub.f32 %v252, %v258
  %v261 = vmul.f32 %v259, 1.442695
  %v262 = vpow.pop %v261
  %v263 = vmul.f32 %v260, 1.442695
  %v264 = vpow.pop %v263
  %265 = vadd.xlane.f32.xlu0 %v262
  %v266 = vpop.xlane.xlu0 %265
  %267 = vadd.xlane.f32.xlu0 %v264
  %v268 = vpop.xlane.xlu0 %267
  %v269 = vlog2.pop %v266
  %v270 = vmul.f32 %v269, 0.6931472
  %v271 = vlog2.pop %v268
  %v272 = vmul.f32 %v271, 0.6931472
  %v273 = vsub.f32 %v259, %v270
  %v274 = vsub.f32 %v260, %v272
  %v275 = vpack.c.bf16 %v274, %v273
  %v277 = vunpack.c.l.b16 %v275
  %v278 = vunpack.c.h.b16 %v275
  %v279 = vpack.c.b16 %v277, %v277
  %v280 = vpack.c.b16 %v278, %v278
  %283 = vst [vmem:[%s7] sm:$0xf] %v279
  %284 = vst [vmem:[%s7 + $0x4] sm:$0xf] %v280
  // Predicated region
  $region30: #{perceptron_forward.1} parent=0 // pred_check
    _
  $region31: #{perceptron_forward.1} parent=0 // pred_check_branch
    %286 = sbr.rel (0) target = $region33
  $region32: #{perceptron_forward.1} parent=0 // pred_region
    _
  $region33: #{perceptron_forward.1} parent=0 // pred_fallthru
    _
  // Predicated region
  $region34: #{perceptron_forward.1} parent=0 // pred_check
    _
  $region35: #{perceptron_forward.1} parent=0 // pred_check_branch
    %288 = sbr.rel (0) target = $region37
  $region36: #{perceptron_forward.1} parent=0 // pred_region
    _
  $region37: #{perceptron_forward.1} parent=0 // pred_fallthru
    _

</llo_original>
